<compile_context>
chip_gen: v6e
topology: v6e:2x2x1
jax: 0.10.0
libtpu: 0.0.40
codegen_flags: <defaults>
</compile_context>

<pallas_src>
import math
import numpy as np
import jax
import jax.numpy as jnp
from jax import lax
from jax.experimental import pallas as pl
from jax.experimental.pallas import tpu as pltpu

# ----------------------------------------------------------------------------
# Hyper-parameters mirroring Encoder.__init__
LAYER_SIZES = [30]
LATENT_SIZE = 8
CONDITIONAL = True
NUM_LABELS = 2

MID_CHANNELS = 15
OUT_CHANNELS = 30
KERNEL_SIZE = 4
STEP = 2

D_IN = LAYER_SIZES[0] + (NUM_LABELS if CONDITIONAL else 0)      # 32
L1_CONV = D_IN - KERNEL_SIZE + 1                                # 29
L1_POOL = L1_CONV // STEP                                       # 14
L2_CONV = L1_POOL - KERNEL_SIZE + 1                             # 11
L2_POOL = L2_CONV // STEP                                       # 5
HIDDEN_UNITS = OUT_CHANNELS * L2_POOL                           # 150
N1 = MID_CHANNELS * L1_POOL                                     # 210 (true stage-1 width)
N2 = OUT_CHANNELS * L2_POOL                                     # 150 (true stage-2 width)

assert HIDDEN_UNITS == OUT_CHANNELS * math.floor(
    (math.floor((D_IN - KERNEL_SIZE + 1) / STEP) - KERNEL_SIZE + 1) / STEP)


def _pad128(n):
    return ((n + 127) // 128) * 128


S1 = _pad128(N1)                                                # 256: lane-padded half width, stage 1
S2 = _pad128(N2)                                                # 256: lane-padded half width, stage 2

BATCH = 8                                                       # demo batch (rows on sublanes)


# ----------------------------------------------------------------------------
# Fused Pallas kernel: conv1+relu+pool -> conv2+relu+pool
#   pool(relu(conv(x))) == relu(max(x@W_even, x@W_odd) + bias); the even/odd weights
#   are concatenated (each half padded to a 128-lane multiple) so one dot feeds both.
def _encoder_conv_kernel(x_ref, w1_ref, b1_ref, w2_ref, b2_ref, out_ref):
    # Stage 1: (B, 32) bf16 @ (32, 2*S1) bf16 -> f32
    r1 = jnp.dot(x_ref[...], w1_ref[...], preferred_element_type=jnp.float32)
    # even/odd halves start at lanes 0 and S1 (multiples of 128) -> free views.
    p1 = jnp.maximum(jnp.maximum(r1[:, :S1], r1[:, S1:]) + b1_ref[...], 0.0)   # (B, S1)
    # padded columns of p1 are exactly 0 (max(0,0)+0), and the matching rows of w2 are 0.

    # Stage 2: (B, S1) bf16 @ (S1, 2*S2) bf16 -> f32
    r2 = jnp.dot(p1.astype(jnp.bfloat16), w2_ref[...],
                 preferred_element_type=jnp.float32)
    # Lane-dense (B, 256) f32 output (no masked partial stores).
    out_ref[...] = jnp.maximum(jnp.maximum(r2[:, :S2], r2[:, S2:]) + b2_ref[...], 0.0)


def encoder_pallas(x2d, w1f, b1p, w2f, b2p):
    """Single gridless pallas_call; every operand whole-array in VMEM."""
    B = x2d.shape[0]
    vmem = pl.BlockSpec(memory_space=pltpu.MemorySpace.VMEM)
    return pl.pallas_call(
        _encoder_conv_kernel,
        out_shape=jax.ShapeDtypeStruct((B, S2), jnp.float32),
        in_specs=[vmem] * 5,
        out_specs=vmem,
    )(x2d, w1f, b1p, w2f, b2p)


# ----------------------------------------------------------------------------
# Host-side parameter setup and structured-matrix construction (done once)
def init_params(key):
    ks = jax.random.split(key, 8)

    def u(k, shape, fan_in):
        bound = 1.0 / math.sqrt(fan_in)
        return jax.random.uniform(k, shape, jnp.float32, -bound, bound)

    return {
        'conv1_w': u(ks[0], (MID_CHANNELS, 1, 1, KERNEL_SIZE), 1 * KERNEL_SIZE),
        'conv1_b': u(ks[1], (MID_CHANNELS,), 1 * KERNEL_SIZE),
        'conv2_w': u(ks[2], (OUT_CHANNELS, MID_CHANNELS, 1, KERNEL_SIZE), MID_CHANNELS * KERNEL_SIZE),
        'conv2_b': u(ks[3], (OUT_CHANNELS,), MID_CHANNELS * KERNEL_SIZE),
        'wm': u(ks[4], (LATENT_SIZE, HIDDEN_UNITS), HIDDEN_UNITS),
        'bm': u(ks[5], (LATENT_SIZE,), HIDDEN_UNITS),
        'wv': u(ks[6], (LATENT_SIZE, HIDDEN_UNITS), HIDDEN_UNITS),
        'bv': u(ks[7], (LATENT_SIZE,), HIDDEN_UNITS),
    }


def build_conv_pool_mats(w, b, L_in):
    """(1,K) valid conv + (1,2) floor max-pool as two banded matmuls (even/odd positions).

    Output columns are indexed c_out*L_pool + p.  pool(relu(conv)) is recovered in-kernel
    as relu(max(x@We, x@Wo) + bias) since relu/max commute and the bias is shared.
    """
    C_out, C_in, _, K = w.shape
    L_conv = L_in - K + 1
    L_pool = L_conv // STEP
    wn = np.asarray(w, np.float32)
    We = np.zeros((C_in * L_in, C_out * L_pool), np.float32)
    Wo = np.zeros((C_in * L_in, C_out * L_pool), np.float32)
    for o in range(C_out):
        for m in range(C_in):
            for k in range(K):
                for p in range(L_pool):
                    We[m * L_in + STEP * p + k, o * L_pool + p] = wn[o, m, 0, k]
                    Wo[m * L_in + STEP * p + 1 + k, o * L_pool + p] = wn[o, m, 0, k]
    brep = np.repeat(np.asarray(b, np.float32), L_pool)[None, :]
    return We, Wo, brep


def build_mats(params):
    """Fuse even/odd banded conv weights (padded to 128-lane halves) + dense head mats.

    Weight matrices that feed the MXU are cast to bf16 (f32 accumulation in-kernel);
    biases and the tiny head stay f32.  Nothing here depends on the batch size.
    """
    w1e, w1o, b1 = build_conv_pool_mats(params['conv1_w'], params['conv1_b'], D_IN)     # (32, 210)
    w2e, w2o, b2 = build_conv_pool_mats(params['conv2_w'], params['conv2_b'], L1_POOL)  # (210, 150)

    w1f = np.zeros((D_IN, 2 * S1), np.float32)
    w1f[:, :N1] = w1e
    w1f[:, S1:S1 + N1] = w1o
    b1p = np.zeros((1, S1), np.float32)
    b1p[:, :N1] = b1

    w2f = np.zeros((S1, 2 * S2), np.float32)        # rows N1..S1 are zero (match p1 padding)
    w2f[:N1, :N2] = w2e
    w2f[:N1, S2:S2 + N2] = w2o
    b2p = np.zeros((1, S2), np.float32)
    b2p[:, :N2] = b2

    wcat = np.concatenate([np.asarray(params['wm'], np.float32).T,
                           np.asarray(params['wv'], np.float32).T], axis=1)             # (150, 2L)
    bcat = np.concatenate([np.asarray(params['bm'], np.float32),
                           np.asarray(params['bv'], np.float32)])[None, :]              # (1, 2L)

    return (jnp.asarray(w1f, jnp.bfloat16), jnp.asarray(b1p, jnp.float32),
            jnp.asarray(w2f, jnp.bfloat16), jnp.asarray(b2p, jnp.float32),
            jnp.asarray(wcat, jnp.float32), jnp.asarray(bcat, jnp.float32))


# ----------------------------------------------------------------------------
# Forward pass (jitted wrapper + fused kernel).  No host syncs.
def _onehot_nchw(idx, dtype=jnp.float32):
    # TODO(synk): PyTorch's idx2onehot does a host-syncing `assert torch.max(idx).item() < n`;
    # omitted here (jit-unsafe); labels are assumed in-range.
    idx = jnp.reshape(idx, (-1,))
    return jax.nn.one_hot(idx, NUM_LABELS, dtype=dtype)[None, None]      # (1,1,B,n)


@jax.jit
def encoder_forward(x, c, mats):
    w1f, b1p, w2f, b2p, wcat, bcat = mats
    if CONDITIONAL:
        x = jnp.concatenate([x, _onehot_nchw(c, x.dtype)], axis=-1)      # (1,1,B,D_IN)
    x2d = x[0, 0].astype(jnp.bfloat16)                                   # (B, D_IN)
    B = x2d.shape[0]

    p2 = encoder_pallas(x2d, w1f, b1p, w2f, b2p)[:, :N2]                 # (B, 150) f32

    # PyTorch `h2.view(-1, hidden)` batch/channel mixing + both linear heads as tiny
    # XLA ops (per perf review opt #3a: removes the 600 KiB mostly-zero head tensor
    # and the 8 rank-1 MXU pushes the previous kernel carried).
    h2v = jnp.transpose(p2.reshape(B, OUT_CHANNELS, L2_POOL), (1, 0, 2)).reshape(-1, HIDDEN_UNITS)
    out = h2v @ wcat + bcat                                              # (B, 2*LATENT)
    return out[:, :LATENT_SIZE], out[:, LATENT_SIZE:]


# ----------------------------------------------------------------------------
# Pure-JAX reference (mirrors the PyTorch ops, f32 throughout) for validation
def reference_forward(x, c, params):
    if CONDITIONAL:
        x = jnp.concatenate([x, _onehot_nchw(c, x.dtype)], axis=-1)
    dn = ('NCHW', 'OIHW', 'NCHW')
    h1 = lax.conv_general_dilated(x, params['conv1_w'], (1, 1), 'VALID',
                                  dimension_numbers=dn)
    h1 = jnp.maximum(h1 + params['conv1_b'][None, :, None, None], 0.0)
    h1 = lax.reduce_window(h1, -jnp.inf, lax.max, (1, 1, 1, STEP), (1, 1, 1, STEP), 'VALID')
    h2 = lax.conv_general_dilated(h1, params['conv2_w'], (1, 1), 'VALID',
                                  dimension_numbers=dn)
    h2 = jnp.maximum(h2 + params['conv2_b'][None, :, None, None], 0.0)
    h2 = lax.reduce_window(h2, -jnp.inf, lax.max, (1, 1, 1, STEP), (1, 1, 1, STEP), 'VALID')
    h2v = h2.reshape(-1, HIDDEN_UNITS)
    means = h2v @ params['wm'].T + params['bm']
    log_vars = h2v @ params['wv'].T + params['bv']
    return means, log_vars


# ----------------------------------------------------------------------------
if __name__ == "__main__":
    key = jax.random.PRNGKey(0)
    kp, kx, kc = jax.random.split(key, 3)

    params = init_params(kp)
    mats = build_mats(params)

    B = BATCH
    x = jax.random.normal(kx, (1, 1, B, LAYER_SIZES[0]), jnp.float32)    # NCHW input
    c = jax.random.randint(kc, (B,), 0, NUM_LABELS, jnp.int32)           # labels

    means, log_vars = encoder_forward(x, c, mats)
    jax.block_until_ready((means, log_vars))

    ref_means, ref_logv = reference_forward(x, c, params)
    assert means.shape == (B, LATENT_SIZE) and log_vars.shape == (B, LATENT_SIZE)
    # Tolerance accounts for bf16 weights/activations on the MXU path (f32 accumulation).
    np.testing.assert_allclose(np.asarray(means), np.asarray(ref_means), rtol=2e-2, atol=2e-2)
    np.testing.assert_allclose(np.asarray(log_vars), np.asarray(ref_logv), rtol=2e-2, atol=2e-2)
    print("KERNEL_OK")
</pallas_src>

<mosaic_0001>
module attributes {stable_mosaic.version = 11 : i64} {
  func.func @_encoder_conv_kernel(%arg0: memref<8x32xbf16, #tpu.memory_space<vmem>>, %arg1: memref<32x512xbf16, #tpu.memory_space<vmem>>, %arg2: memref<1x256xf32, #tpu.memory_space<vmem>>, %arg3: memref<256x512xbf16, #tpu.memory_space<vmem>>, %arg4: memref<1x256xf32, #tpu.memory_space<vmem>>, %arg5: memref<8x256xf32, #tpu.memory_space<vmem>>) attributes {dimension_semantics = [], scalar_prefetch = 0 : i64, scratch_operands = 0 : i64, tpu.core_type = #tpu.core_type<tc>} {
    %c0 = arith.constant 0 : index
    %c0_0 = arith.constant 0 : index
    %0 = vector.load %arg0[%c0, %c0_0] : memref<8x32xbf16, #tpu.memory_space<vmem>>, vector<8x32xbf16>
    %c0_1 = arith.constant 0 : index
    %c0_2 = arith.constant 0 : index
    %1 = vector.load %arg1[%c0_1, %c0_2] : memref<32x512xbf16, #tpu.memory_space<vmem>>, vector<32x512xbf16>
    %cst = arith.constant dense<0.000000e+00> : vector<8x512xf32>
    %2 = tpu.matmul %0, %1, %cst {dimension_numbers = #tpu.dot_dimension_numbers<[1], [0], [0], [1], [0, 0, 1, 1], [], []>} : vector<8x32xbf16>, vector<32x512xbf16>, vector<8x512xf32> -> vector<8x512xf32>
    %3 = vector.extract_strided_slice %2 {offsets = [0, 0], sizes = [8, 256], strides = [1, 1]} : vector<8x512xf32> to vector<8x256xf32>
    %4 = vector.extract_strided_slice %2 {offsets = [0, 256], sizes = [8, 256], strides = [1, 1]} : vector<8x512xf32> to vector<8x256xf32>
    %5 = arith.maximumf %3, %4 : vector<8x256xf32>
    %c0_3 = arith.constant 0 : index
    %c0_4 = arith.constant 0 : index
    %6 = vector.load %arg2[%c0_3, %c0_4] : memref<1x256xf32, #tpu.memory_space<vmem>>, vector<1x256xf32>
    %7 = vector.broadcast %6 : vector<1x256xf32> to vector<8x256xf32>
    %8 = arith.addf %5, %7 : vector<8x256xf32>
    %cst_5 = arith.constant 0.000000e+00 : f32
    %9 = vector.broadcast %cst_5 : f32 to vector<8x256xf32>
    %10 = arith.maximumf %8, %9 : vector<8x256xf32>
    %11 = arith.truncf %10 : vector<8x256xf32> to vector<8x256xbf16>
    %c0_6 = arith.constant 0 : index
    %c0_7 = arith.constant 0 : index
    %12 = vector.load %arg3[%c0_6, %c0_7] : memref<256x512xbf16, #tpu.memory_space<vmem>>, vector<256x512xbf16>
    %cst_8 = arith.constant dense<0.000000e+00> : vector<8x512xf32>
    %13 = tpu.matmul %11, %12, %cst_8 {dimension_numbers = #tpu.dot_dimension_numbers<[1], [0], [0], [1], [0, 0, 1, 1], [], []>} : vector<8x256xbf16>, vector<256x512xbf16>, vector<8x512xf32> -> vector<8x512xf32>
    %14 = vector.extract_strided_slice %13 {offsets = [0, 0], sizes = [8, 256], strides = [1, 1]} : vector<8x512xf32> to vector<8x256xf32>
    %15 = vector.extract_strided_slice %13 {offsets = [0, 256], sizes = [8, 256], strides = [1, 1]} : vector<8x512xf32> to vector<8x256xf32>
    %16 = arith.maximumf %14, %15 : vector<8x256xf32>
    %c0_9 = arith.constant 0 : index
    %c0_10 = arith.constant 0 : index
    %17 = vector.load %arg4[%c0_9, %c0_10] : memref<1x256xf32, #tpu.memory_space<vmem>>, vector<1x256xf32>
    %18 = vector.broadcast %17 : vector<1x256xf32> to vector<8x256xf32>
    %19 = arith.addf %16, %18 : vector<8x256xf32>
    %cst_11 = arith.constant 0.000000e+00 : f32
    %20 = vector.broadcast %cst_11 : f32 to vector<8x256xf32>
    %21 = arith.maximumf %19, %20 : vector<8x256xf32>
    %c0_12 = arith.constant 0 : index
    %c0_13 = arith.constant 0 : index
    %22 = vector.load %arg5[%c0_12, %c0_13] : memref<8x256xf32, #tpu.memory_space<vmem>>, vector<8x256xf32>
    tpu.vector_store %arg5[%c0_12, %c0_13], %21 {strides = array<i32>} : memref<8x256xf32, #tpu.memory_space<vmem>>, vector<8x256xf32>,
    return
  }
}

</mosaic_0001>

<llo_original>
// kernel: encoder_forward.1
$region0: #{encoder_forward.1}
  #allocation0 [shape = 'u32[]', space=smem, size = 0x4, offset = 0x4, fixed_abs, tag = 'smem constant byte address 0x4 - core index']
  #allocation1 [shape = 'u32[144,128]{1,0:T(1,128)}', space=vmem, size = 0x12000, scoped, tag = 'internal scratch']
  %s0 = inlined_call_operand.vmem [shape: bf16[8,32], index: 0, kind: input, shape index: {}]
  %s1 = inlined_call_operand.hbm [shape: bf16[32,512], index: 1, kind: input, shape index: {}]
  %s2 = inlined_call_operand.vmem [shape: f32[1,256], index: 2, kind: input, shape index: {}]
  %s3 = inlined_call_operand.hbm [shape: bf16[256,512], index: 3, kind: input, shape index: {}]
  %s4 = inlined_call_operand.vmem [shape: f32[1,256], index: 4, kind: input, shape index: {}]
  %s5 = inlined_call_operand.vmem [shape: f32[8,256], index: 5, kind: output, shape index: {}]
  %s6 = sld [smem:[#allocation0]]
  $region38: #{encoder_forward.1} parent=0
    _
  %s8 = ssub.s32 1, %s6
  %s9 = scalar_select 0, %s8, %s6
  $region1: #{encoder_forward.1} parent=0
    #allocation2 [shape = 'u8[32768]{0}', space=vmem, size = 0x8000, scoped, tag = 'input window, operand 1, single buffered']
    #allocation3 [shape = 's32[1]{0}', space=sflag, size = 0x4, scoped, tag = 'scoped memory for encoder_forward.1']
    #allocation4 [shape = 'u8[262144]{0}', space=vmem, size = 0x40000, scoped, tag = 'input window, operand 3, single buffered']
    #allocation5 [shape = 's32[1]{0}', space=sflag, size = 0x4, scoped, tag = 'scoped memory for encoder_forward.1']
    %10 = vsyncpa [#allocation3], 0
    %11 = vsyncpa [#allocation5], 0
    // Predicated region
    $region2: #{encoder_forward.1} parent=1 // pred_check
      _
    $region3: #{encoder_forward.1} parent=1 // pred_check_branch
      %13 = sbr.rel (0) target = $region5
    $region4: #{encoder_forward.1} parent=1 // pred_region
      _
    $region5: #{encoder_forward.1} parent=1 // pred_fallthru
      _
    // Predicated region
    $region6: #{encoder_forward.1} parent=1 // pred_check
      _
    $region7: #{encoder_forward.1} parent=1 // pred_check_branch
      %15 = sbr.rel (0) target = $region9
    $region8: #{encoder_forward.1} parent=1 // pred_region
      %s17 = ssub.s32 1024, 1024
      %18 = vsyncadd [#allocation3], %s17
      %s19 = sshll.u32 [#allocation2], 4
      %s20 = int_to_ptr.vmem [resolvable:$true] %s19
      %25 = dma.hbm_to_vmem [thread:$0]  %s1, 1024, %s20, [#allocation3], 256, 256, 16
    $region9: #{encoder_forward.1} parent=1 // pred_fallthru
      _
    // Predicated region
    $region10: #{encoder_forward.1} parent=1 // pred_check
      _
    $region11: #{encoder_forward.1} parent=1 // pred_check_branch
      %27 = sbr.rel (0) target = $region13
    $region12: #{encoder_forward.1} parent=1 // pred_region
      _
    $region13: #{encoder_forward.1} parent=1 // pred_fallthru
      _
    // Predicated region
    $region14: #{encoder_forward.1} parent=1 // pred_check
      _
    $region15: #{encoder_forward.1} parent=1 // pred_check_branch
      %29 = sbr.rel (0) target = $region17
    $region16: #{encoder_forward.1} parent=1 // pred_region
      %s31 = ssub.s32 8192, 8192
      %32 = vsyncadd [#allocation5], %s31
      %s33 = sshll.u32 [#allocation4], 4
      %s34 = int_to_ptr.vmem [resolvable:$true] %s33
      %39 = dma.hbm_to_vmem [thread:$0]  %s3, 8192, %s34, [#allocation5], 256, 256, 16
    $region17: #{encoder_forward.1} parent=1 // pred_fallthru
      _
    // Predicated region
    $region18: #{encoder_forward.1} parent=1 // pred_check
      _
    $region19: #{encoder_forward.1} parent=1 // pred_check_branch
      %41 = sbr.rel (0) target = $region21
    $region20: #{encoder_forward.1} parent=1 // pred_region
      _
    $region21: #{encoder_forward.1} parent=1 // pred_fallthru
      _
    // Predicated region
    $region22: #{encoder_forward.1} parent=1 // pred_check
      _
    $region23: #{encoder_forward.1} parent=1 // pred_check_branch
      %43 = sbr.rel (0) target = $region25
    $region24: #{encoder_forward.1} parent=1 // pred_region
      %44 = dma.done [#allocation3], 1024
    $region25: #{encoder_forward.1} parent=1 // pred_fallthru
      _
    // Predicated region
    $region26: #{encoder_forward.1} parent=1 // pred_check
      _
    $region27: #{encoder_forward.1} parent=1 // pred_check_branch
      %46 = sbr.rel (0) target = $region29
    $region28: #{encoder_forward.1} parent=1 // pred_region
      %47 = dma.done [#allocation5], 8192
    $region29: #{encoder_forward.1} parent=1 // pred_fallthru
      _
    %v49 = vld [vmem:[%s0] sm:$0xf]
    %v50 = vld [vmem:[#allocation2] sm:$0xff]
    %v51 = vld [vmem:[#allocation2 + $0x8] sm:$0xff]
    %v52 = vld [vmem:[#allocation2 + $0x10] sm:$0xff]
    %v53 = vld [vmem:[#allocation2 + $0x18] sm:$0xff]
    %v54 = vld [vmem:[#allocation2 + $0x20] sm:$0xff]
    %v55 = vld [vmem:[#allocation2 + $0x28] sm:$0xff]
    %v56 = vld [vmem:[#allocation2 + $0x30] sm:$0xff]
    %v57 = vld [vmem:[#allocation2 + $0x38] sm:$0xff]
    %v66 = vunpack.c.l.b16 %v50
    %v67 = vunpack.c.h.b16 %v50
    %v68 = vunpack.c.l.b16 %v51
    %v69 = vunpack.c.h.b16 %v51
    %v70 = vunpack.c.l.b16 %v52
    %v71 = vunpack.c.h.b16 %v52
    %v72 = vunpack.c.l.b16 %v53
    %v73 = vunpack.c.h.b16 %v53
    %v74 = vunpack.c.l.b16 %v54
    %v75 = vunpack.c.h.b16 %v54
    %v76 = vunpack.c.l.b16 %v55
    %v77 = vunpack.c.h.b16 %v55
    %v78 = vunpack.c.l.b16 %v56
    %v79 = vunpack.c.h.b16 %v56
    %v80 = vunpack.c.l.b16 %v57
    %v81 = vunpack.c.h.b16 %v57
    %v82 = vpack.c.b16 %v70, %v66
    %v83 = vpack.c.b16 %v71, %v67
    %v84 = vpack.c.b16 %v72, %v68
    %v85 = vpack.c.b16 %v73, %v69
    %v86 = vpack.c.b16 %v78, %v74
    %v87 = vpack.c.b16 %v79, %v75
    %v88 = vpack.c.b16 %v80, %v76
    %v89 = vpack.c.b16 %v81, %v77
    %vm98 = vcmask 261120
    %v100 = vsel %vm98, %v49, 0
    %102 = vmatprep.subr.bf16.mxu0 0
    %103 = vmatpush1.bf16.msra.mxu0 0
    %104 = vmatprep.subr.bf16.mxu0 0
    %105 = vmatpush1.bf16.msra.mxu0 0
    %106 = vmatprep.subr.bf16.mxu0 0
    %107 = vmatpush1.bf16.msra.mxu0 0
    %108 = vmatprep.subr.bf16.mxu0 0
    %109 = vmatpush1.bf16.msra.mxu0 0
    %110 = vmatprep.subr.bf16.mxu0 0
    %111 = vmatpush1.bf16.msra.mxu0 0
    %112 = vmatprep.subr.bf16.mxu0 0
    %113 = vmatpush1.bf16.msra.mxu0 0
    %114 = vmatprep.subr.bf16.mxu0 %v87
    %115 = vmatpush1.bf16.msra.mxu0 %v86
    %116 = vmatprep.subr.bf16.mxu0 %v83
    %117 = vmatpush1.bf16.msra.mxu0 %v82
    %118 = vmatprep.subr.bf16.mxu0 0
    %119 = vmatpush2.bf16.msra.mxu0 0
    %120 = vmatprep.subr.bf16.mxu0 0
    %121 = vmatpush2.bf16.msra.mxu0 0
    %122 = vmatprep.subr.bf16.mxu0 0
    %123 = vmatpush2.bf16.msra.mxu0 0
    %124 = vmatprep.subr.bf16.mxu0 0
    %125 = vmatpush2.bf16.msra.mxu0 0
    %126 = vmatprep.subr.bf16.mxu0 0
    %127 = vmatpush2.bf16.msra.mxu0 0
    %128 = vmatprep.subr.bf16.mxu0 0
    %129 = vmatpush2.bf16.msra.mxu0 0
    %130 = vmatprep.subr.bf16.mxu0 0
    %131 = vmatpush2.bf16.msra.mxu0 0
    %132 = vmatprep.subr.bf16.mxu0 0
    %133 = vmatpush2.bf16.msra.mxu0 0
    %134 = vmatprep.mubr.bf16.mxu0 0
    %135 = vmatmul.mubr.bf16.gmra.mxu0 %v100
    %v136 = vpop.f32.mrf.mxu0
    %v137 = vadd.f32 0.0, %v136
    %v138 = vpop.f32.mrf.mxu0
    %v139 = vadd.f32 0.0, %v138
    %v140 = vpop.f32.mrf.mxu0
    %v141 = vpop.f32.mrf.mxu0
    %142 = vdwg.mxu0
    %143 = vmatprep.subr.bf16.mxu0 0
    %144 = vmatpush1.bf16.msra.mxu0 0
    %145 = vmatprep.subr.bf16.mxu0 0
    %146 = vmatpush1.bf16.msra.mxu0 0
    %147 = vmatprep.subr.bf16.mxu0 0
    %148 = vmatpush1.bf16.msra.mxu0 0
    %149 = vmatprep.subr.bf16.mxu0 0
    %150 = vmatpush1.bf16.msra.mxu0 0
    %151 = vmatprep.subr.bf16.mxu0 0
    %152 = vmatpush1.bf16.msra.mxu0 0
    %153 = vmatprep.subr.bf16.mxu0 0
    %154 = vmatpush1.bf16.msra.mxu0 0
    %155 = vmatprep.subr.bf16.mxu0 %v89
    %156 = vmatpush1.bf16.msra.mxu0 %v88
    %157 = vmatprep.subr.bf16.mxu0 %v85
    %158 = vmatpush1.bf16.msra.mxu0 %v84
    %159 = vmatprep.subr.bf16.mxu0 0
    %160 = vmatpush2.bf16.msra.mxu0 0
    %161 = vmatprep.subr.bf16.mxu0 0
    %162 = vmatpush2.bf16.msra.mxu0 0
    %163 = vmatprep.subr.bf16.mxu0 0
    %164 = vmatpush2.bf16.msra.mxu0 0
    %165 = vmatprep.subr.bf16.mxu0 0
    %166 = vmatpush2.bf16.msra.mxu0 0
    %167 = vmatprep.subr.bf16.mxu0 0
    %168 = vmatpush2.bf16.msra.mxu0 0
    %169 = vmatprep.subr.bf16.mxu0 0
    %170 = vmatpush2.bf16.msra.mxu0 0
    %171 = vmatprep.subr.bf16.mxu0 0
    %172 = vmatpush2.bf16.msra.mxu0 0
    %173 = vmatprep.subr.bf16.mxu0 0
    %174 = vmatpush2.bf16.msra.mxu0 0
    %175 = vmatprep.mubr.bf16.mxu0 0
    %176 = vmatmul.mubr.bf16.gmra.mxu0 %v100
    %v177 = vpop.f32.mrf.mxu0
    %v178 = vadd.f32 0.0, %v177
    %v179 = vpop.f32.mrf.mxu0
    %v180 = vadd.f32 0.0, %v179
    %v181 = vpop.f32.mrf.mxu0
    %v182 = vpop.f32.mrf.mxu0
    %183 = vdwg.mxu0
    %v184 = vmax.f32 %v137, %v178
    %v185 = vmax.f32 %v139, %v180
    %v186 = vld [vmem:[%s2] sm:$0x3]
    %v188 = vlaneseq
    %v189 = vshrl.u32 %v188, 7
    %v190 = vsub.s32 0, %v189
    %v191 = vrot.slane %v186, %v190
    %v192 = vlaneseq
    %v193 = vshrl.u32 %v192, 7
    %v194 = vsub.s32 1, %v193
    %v195 = vrot.slane %v186, %v194
    %v198 = vadd.f32 %v184, %v191
    %v199 = vadd.f32 %v185, %v195
    %v200 = vmax.f32 %v198, 0.0
    %v201 = vmax.f32 %v199, 0.0
    %v202 = vpack.c.bf16 %v200, %v200
    %v203 = vpack.c.bf16 %v201, %v201
    %v204 = vld [vmem:[#allocation4] sm:$0xff]
    %v205 = vld [vmem:[#allocation4 + $0x8] sm:$0xff]
    %v206 = vld [vmem:[#allocation4 + $0x10] sm:$0xff]
    %v207 = vld [vmem:[#allocation4 + $0x18] sm:$0xff]
    %v208 = vld [vmem:[#allocation4 + $0x20] sm:$0xff]
    %v209 = vld [vmem:[#allocation4 + $0x28] sm:$0xff]
    %v210 = vld [vmem:[#allocation4 + $0x30] sm:$0xff]
    %v211 = vld [vmem:[#allocation4 + $0x38] sm:$0xff]
    %v212 = vld [vmem:[#allocation4 + $0x40] sm:$0xff]
    %v213 = vld [vmem:[#allocation4 + $0x48] sm:$0xff]
    %v214 = vld [vmem:[#allocation4 + $0x50] sm:$0xff]
    %v215 = vld [vmem:[#allocation4 + $0x58] sm:$0xff]
    %v216 = vld [vmem:[#allocation4 + $0x60] sm:$0xff]
    %v217 = vld [vmem:[#allocation4 + $0x68] sm:$0xff]
    %v218 = vld [vmem:[#allocation4 + $0x70] sm:$0xff]
    %v219 = vld [vmem:[#allocation4 + $0x78] sm:$0xff]
    %v220 = vld [vmem:[#allocation4 + $0x80] sm:$0xff]
    %v221 = vld [vmem:[#allocation4 + $0x88] sm:$0xff]
    %v222 = vld [vmem:[#allocation4 + $0x90] sm:$0xff]
    %v223 = vld [vmem:[#allocation4 + $0x98] sm:$0xff]
    %v224 = vld [vmem:[#allocation4 + $0xa0] sm:$0xff]
    %v225 = vld [vmem:[#allocation4 + $0xa8] sm:$0xff]
    %v226 = vld [vmem:[#allocation4 + $0xb0] sm:$0xff]
    %v227 = vld [vmem:[#allocation4 + $0xb8] sm:$0xff]
    %v228 = vld [vmem:[#allocation4 + $0xc0] sm:$0xff]
    %v229 = vld [vmem:[#allocation4 + $0xc8] sm:$0xff]
    %v230 = vld [vmem:[#allocation4 + $0xd0] sm:$0xff]
    %v231 = vld [vmem:[#allocation4 + $0xd8] sm:$0xff]
    %v232 = vld [vmem:[#allocation4 + $0xe0] sm:$0xff]
    %v233 = vld [vmem:[#allocation4 + $0xe8] sm:$0xff]
    %v234 = vld [vmem:[#allocation4 + $0xf0] sm:$0xff]
    %v235 = vld [vmem:[#allocation4 + $0xf8] sm:$0xff]
    %v236 = vld [vmem:[#allocation4 + $0x100] sm:$0xff]
    %v237 = vld [vmem:[#allocation4 + $0x108] sm:$0xff]
    %v238 = vld [vmem:[#allocation4 + $0x110] sm:$0xff]
    %v239 = vld [vmem:[#allocation4 + $0x118] sm:$0xff]
    %v240 = vld [vmem:[#allocation4 + $0x120] sm:$0xff]
    %v241 = vld [vmem:[#allocation4 + $0x128] sm:$0xff]
    %v242 = vld [vmem:[#allocation4 + $0x130] sm:$0xff]
    %v243 = vld [vmem:[#allocation4 + $0x138] sm:$0xff]
    %v244 = vld [vmem:[#allocation4 + $0x140] sm:$0xff]
    %v245 = vld [vmem:[#allocation4 + $0x148] sm:$0xff]
    %v246 = vld [vmem:[#allocation4 + $0x150] sm:$0xff]
    %v247 = vld [vmem:[#allocation4 + $0x158] sm:$0xff]
    %v248 = vld [vmem:[#allocation4 + $0x160] sm:$0xff]
    %v249 = vld [vmem:[#allocation4 + $0x168] sm:$0xff]
    %v250 = vld [vmem:[#allocation4 + $0x170] sm:$0xff]
    %v251 = vld [vmem:[#allocation4 + $0x178] sm:$0xff]
    %v252 = vld [vmem:[#allocation4 + $0x180] sm:$0xff]
    %v253 = vld [vmem:[#allocation4 + $0x188] sm:$0xff]
    %v254 = vld [vmem:[#allocation4 + $0x190] sm:$0xff]
    %v255 = vld [vmem:[#allocation4 + $0x198] sm:$0xff]
    %v256 = vld [vmem:[#allocation4 + $0x1a0] sm:$0xff]
    %v257 = vld [vmem:[#allocation4 + $0x1a8] sm:$0xff]
    %v258 = vld [vmem:[#allocation4 + $0x1b0] sm:$0xff]
    %v259 = vld [vmem:[#allocation4 + $0x1b8] sm:$0xff]
    %v260 = vld [vmem:[#allocation4 + $0x1c0] sm:$0xff]
    %v261 = vld [vmem:[#allocation4 + $0x1c8] sm:$0xff]
    %v262 = vld [vmem:[#allocation4 + $0x1d0] sm:$0xff]
    %v263 = vld [vmem:[#allocation4 + $0x1d8] sm:$0xff]
    %v264 = vld [vmem:[#allocation4 + $0x1e0] sm:$0xff]
    %v265 = vld [vmem:[#allocation4 + $0x1e8] sm:$0xff]
    %v266 = vld [vmem:[#allocation4 + $0x1f0] sm:$0xff]
    %v267 = vld [vmem:[#allocation4 + $0x1f8] sm:$0xff]
    %v332 = vunpack.c.l.b16 %v204
    %v333 = vunpack.c.h.b16 %v204
    %v334 = vunpack.c.l.b16 %v205
    %v335 = vunpack.c.h.b16 %v205
    %v336 = vunpack.c.l.b16 %v206
    %v337 = vunpack.c.h.b16 %v206
    %v338 = vunpack.c.l.b16 %v207
    %v339 = vunpack.c.h.b16 %v207
    %v340 = vunpack.c.l.b16 %v208
    %v341 = vunpack.c.h.b16 %v208
    %v342 = vunpack.c.l.b16 %v209
    %v343 = vunpack.c.h.b16 %v209
    %v344 = vunpack.c.l.b16 %v210
    %v345 = vunpack.c.h.b16 %v210
    %v346 = vunpack.c.l.b16 %v211
    %v347 = vunpack.c.h.b16 %v211
    %v348 = vunpack.c.l.b16 %v212
    %v349 = vunpack.c.h.b16 %v212
    %v350 = vunpack.c.l.b16 %v213
    %v351 = vunpack.c.h.b16 %v213
    %v352 = vunpack.c.l.b16 %v214
    %v353 = vunpack.c.h.b16 %v214
    %v354 = vunpack.c.l.b16 %v215
    %v355 = vunpack.c.h.b16 %v215
    %v356 = vunpack.c.l.b16 %v216
    %v357 = vunpack.c.h.b16 %v216
    %v358 = vunpack.c.l.b16 %v217
    %v359 = vunpack.c.h.b16 %v217
    %v360 = vunpack.c.l.b16 %v218
    %v361 = vunpack.c.h.b16 %v218
    %v362 = vunpack.c.l.b16 %v219
    %v363 = vunpack.c.h.b16 %v219
    %v364 = vunpack.c.l.b16 %v220
    %v365 = vunpack.c.h.b16 %v220
    %v366 = vunpack.c.l.b16 %v221
    %v367 = vunpack.c.h.b16 %v221
    %v368 = vunpack.c.l.b16 %v222
    %v369 = vunpack.c.h.b16 %v222
    %v370 = vunpack.c.l.b16 %v223
    %v371 = vunpack.c.h.b16 %v223
    %v372 = vunpack.c.l.b16 %v224
    %v373 = vunpack.c.h.b16 %v224
    %v374 = vunpack.c.l.b16 %v225
    %v375 = vunpack.c.h.b16 %v225
    %v376 = vunpack.c.l.b16 %v226
    %v377 = vunpack.c.h.b16 %v226
    %v378 = vunpack.c.l.b16 %v227
    %v379 = vunpack.c.h.b16 %v227
    %v380 = vunpack.c.l.b16 %v228
    %v381 = vunpack.c.h.b16 %v228
    %v382 = vunpack.c.l.b16 %v229
    %v383 = vunpack.c.h.b16 %v229
    %v384 = vunpack.c.l.b16 %v230
    %v385 = vunpack.c.h.b16 %v230
    %v386 = vunpack.c.l.b16 %v231
    %v387 = vunpack.c.h.b16 %v231
    %v388 = vunpack.c.l.b16 %v232
    %v389 = vunpack.c.h.b16 %v232
    %v390 = vunpack.c.l.b16 %v233
    %v391 = vunpack.c.h.b16 %v233
    %v392 = vunpack.c.l.b16 %v234
    %v393 = vunpack.c.h.b16 %v234
    %v394 = vunpack.c.l.b16 %v235
    %v395 = vunpack.c.h.b16 %v235
    %v396 = vunpack.c.l.b16 %v236
    %v397 = vunpack.c.h.b16 %v236
    %v398 = vunpack.c.l.b16 %v237
    %v399 = vunpack.c.h.b16 %v237
    %v400 = vunpack.c.l.b16 %v238
    %v401 = vunpack.c.h.b16 %v238
    %v402 = vunpack.c.l.b16 %v239
    %v403 = vunpack.c.h.b16 %v239
    %v404 = vunpack.c.l.b16 %v240
    %v405 = vunpack.c.h.b16 %v240
    %v406 = vunpack.c.l.b16 %v241
    %v407 = vunpack.c.h.b16 %v241
    %v408 = vunpack.c.l.b16 %v242
    %v409 = vunpack.c.h.b16 %v242
    %v410 = vunpack.c.l.b16 %v243
    %v411 = vunpack.c.h.b16 %v243
    %v412 = vunpack.c.l.b16 %v244
    %v413 = vunpack.c.h.b16 %v244
    %v414 = vunpack.c.l.b16 %v245
    %v415 = vunpack.c.h.b16 %v245
    %v416 = vunpack.c.l.b16 %v246
    %v417 = vunpack.c.h.b16 %v246
    %v418 = vunpack.c.l.b16 %v247
    %v419 = vunpack.c.h.b16 %v247
    %v420 = vunpack.c.l.b16 %v248
    %v421 = vunpack.c.h.b16 %v248
    %v422 = vunpack.c.l.b16 %v249
    %v423 = vunpack.c.h.b16 %v249
    %v424 = vunpack.c.l.b16 %v250
    %v425 = vunpack.c.h.b16 %v250
    %v426 = vunpack.c.l.b16 %v251
    %v427 = vunpack.c.h.b16 %v251
    %v428 = vunpack.c.l.b16 %v252
    %v429 = vunpack.c.h.b16 %v252
    %v430 = vunpack.c.l.b16 %v253
    %v431 = vunpack.c.h.b16 %v253
    %v432 = vunpack.c.l.b16 %v254
    %v433 = vunpack.c.h.b16 %v254
    %v434 = vunpack.c.l.b16 %v255
    %v435 = vunpack.c.h.b16 %v255
    %v436 = vunpack.c.l.b16 %v256
    %v437 = vunpack.c.h.b16 %v256
    %v438 = vunpack.c.l.b16 %v257
    %v439 = vunpack.c.h.b16 %v257
    %v440 = vunpack.c.l.b16 %v258
    %v441 = vunpack.c.h.b16 %v258
    %v442 = vunpack.c.l.b16 %v259
    %v443 = vunpack.c.h.b16 %v259
    %v444 = vunpack.c.l.b16 %v260
    %v445 = vunpack.c.h.b16 %v260
    %v446 = vunpack.c.l.b16 %v261
    %v447 = vunpack.c.h.b16 %v261
    %v448 = vunpack.c.l.b16 %v262
    %v449 = vunpack.c.h.b16 %v262
    %v450 = vunpack.c.l.b16 %v263
    %v451 = vunpack.c.h.b16 %v263
    %v452 = vunpack.c.l.b16 %v264
    %v453 = vunpack.c.h.b16 %v264
    %v454 = vunpack.c.l.b16 %v265
    %v455 = vunpack.c.h.b16 %v265
    %v456 = vunpack.c.l.b16 %v266
    %v457 = vunpack.c.h.b16 %v266
    %v458 = vunpack.c.l.b16 %v267
    %v459 = vunpack.c.h.b16 %v267
    %v460 = vpack.c.b16 %v336, %v332
    %v461 = vpack.c.b16 %v337, %v333
    %v462 = vpack.c.b16 %v338, %v334
    %v463 = vpack.c.b16 %v339, %v335
    %v464 = vpack.c.b16 %v344, %v340
    %v465 = vpack.c.b16 %v345, %v341
    %v466 = vpack.c.b16 %v346, %v342
    %v467 = vpack.c.b16 %v347, %v343
    %v468 = vpack.c.b16 %v352, %v348
    %v469 = vpack.c.b16 %v353, %v349
    %v470 = vpack.c.b16 %v354, %v350
    %v471 = vpack.c.b16 %v355, %v351
    %v472 = vpack.c.b16 %v360, %v356
    %v473 = vpack.c.b16 %v361, %v357
    %v474 = vpack.c.b16 %v362, %v358
    %v475 = vpack.c.b16 %v363, %v359
    %v476 = vpack.c.b16 %v368, %v364
    %v477 = vpack.c.b16 %v369, %v365
    %v478 = vpack.c.b16 %v370, %v366
    %v479 = vpack.c.b16 %v371, %v367
    %v480 = vpack.c.b16 %v376, %v372
    %v481 = vpack.c.b16 %v377, %v373
    %v482 = vpack.c.b16 %v378, %v374
    %v483 = vpack.c.b16 %v379, %v375
    %v484 = vpack.c.b16 %v384, %v380
    %v485 = vpack.c.b16 %v385, %v381
    %v486 = vpack.c.b16 %v386, %v382
    %v487 = vpack.c.b16 %v387, %v383
    %v488 = vpack.c.b16 %v392, %v388
    %v489 = vpack.c.b16 %v393, %v389
    %v490 = vpack.c.b16 %v394, %v390
    %v491 = vpack.c.b16 %v395, %v391
    %v492 = vpack.c.b16 %v400, %v396
    %v493 = vpack.c.b16 %v401, %v397
    %v494 = vpack.c.b16 %v402, %v398
    %v495 = vpack.c.b16 %v403, %v399
    %v496 = vpack.c.b16 %v408, %v404
    %v497 = vpack.c.b16 %v409, %v405
    %v498 = vpack.c.b16 %v410, %v406
    %v499 = vpack.c.b16 %v411, %v407
    %v500 = vpack.c.b16 %v416, %v412
    %v501 = vpack.c.b16 %v417, %v413
    %v502 = vpack.c.b16 %v418, %v414
    %v503 = vpack.c.b16 %v419, %v415
    %v504 = vpack.c.b16 %v424, %v420
    %v505 = vpack.c.b16 %v425, %v421
    %v506 = vpack.c.b16 %v426, %v422
    %v507 = vpack.c.b16 %v427, %v423
    %v508 = vpack.c.b16 %v432, %v428
    %v509 = vpack.c.b16 %v433, %v429
    %v510 = vpack.c.b16 %v434, %v430
    %v511 = vpack.c.b16 %v435, %v431
    %v512 = vpack.c.b16 %v440, %v436
    %v513 = vpack.c.b16 %v441, %v437
    %v514 = vpack.c.b16 %v442, %v438
    %v515 = vpack.c.b16 %v443, %v439
    %v516 = vpack.c.b16 %v448, %v444
    %v517 = vpack.c.b16 %v449, %v445
    %v518 = vpack.c.b16 %v450, %v446
    %v519 = vpack.c.b16 %v451, %v447
    %v520 = vpack.c.b16 %v456, %v452
    %v521 = vpack.c.b16 %v457, %v453
    %v522 = vpack.c.b16 %v458, %v454
    %v523 = vpack.c.b16 %v459, %v455
    %588 = vmatprep.subr.bf16.mxu0 %v489
    %589 = vmatpush1.bf16.msra.mxu0 %v488
    %590 = vmatprep.subr.bf16.mxu0 %v485
    %591 = vmatpush1.bf16.msra.mxu0 %v484
    %592 = vmatprep.subr.bf16.mxu0 %v481
    %593 = vmatpush1.bf16.msra.mxu0 %v480
    %594 = vmatprep.subr.bf16.mxu0 %v477
    %595 = vmatpush1.bf16.msra.mxu0 %v476
    %596 = vmatprep.subr.bf16.mxu0 %v473
    %597 = vmatpush1.bf16.msra.mxu0 %v472
    %598 = vmatprep.subr.bf16.mxu0 %v469
    %599 = vmatpush1.bf16.msra.mxu0 %v468
    %600 = vmatprep.subr.bf16.mxu0 %v465
    %601 = vmatpush1.bf16.msra.mxu0 %v464
    %602 = vmatprep.subr.bf16.mxu0 %v461
    %603 = vmatpush1.bf16.msra.mxu0 %v460
    %604 = vmatprep.subr.bf16.mxu0 %v521
    %605 = vmatpush2.bf16.msra.mxu0 %v520
    %606 = vmatprep.subr.bf16.mxu0 %v517
    %607 = vmatpush2.bf16.msra.mxu0 %v516
    %608 = vmatprep.subr.bf16.mxu0 %v513
    %609 = vmatpush2.bf16.msra.mxu0 %v512
    %610 = vmatprep.subr.bf16.mxu0 %v509
    %611 = vmatpush2.bf16.msra.mxu0 %v508
    %612 = vmatprep.subr.bf16.mxu0 %v505
    %613 = vmatpush2.bf16.msra.mxu0 %v504
    %614 = vmatprep.subr.bf16.mxu0 %v501
    %615 = vmatpush2.bf16.msra.mxu0 %v500
    %616 = vmatprep.subr.bf16.mxu0 %v497
    %617 = vmatpush2.bf16.msra.mxu0 %v496
    %618 = vmatprep.subr.bf16.mxu0 %v493
    %619 = vmatpush2.bf16.msra.mxu0 %v492
    %620 = vmatprep.mubr.bf16.mxu0 %v203
    %621 = vmatmul.mubr.bf16.gmra.mxu0 %v202
    %v622 = vpop.f32.mrf.mxu0
    %v623 = vadd.f32 0.0, %v622
    %v624 = vpop.f32.mrf.mxu0
    %v625 = vadd.f32 0.0, %v624
    %v626 = vpop.f32.mrf.mxu0
    %v627 = vpop.f32.mrf.mxu0
    %628 = vdwg.mxu0
    %629 = vmatprep.subr.bf16.mxu0 %v491
    %630 = vmatpush1.bf16.msra.mxu0 %v490
    %631 = vmatprep.subr.bf16.mxu0 %v487
    %632 = vmatpush1.bf16.msra.mxu0 %v486
    %633 = vmatprep.subr.bf16.mxu0 %v483
    %634 = vmatpush1.bf16.msra.mxu0 %v482
    %635 = vmatprep.subr.bf16.mxu0 %v479
    %636 = vmatpush1.bf16.msra.mxu0 %v478
    %637 = vmatprep.subr.bf16.mxu0 %v475
    %638 = vmatpush1.bf16.msra.mxu0 %v474
    %639 = vmatprep.subr.bf16.mxu0 %v471
    %640 = vmatpush1.bf16.msra.mxu0 %v470
    %641 = vmatprep.subr.bf16.mxu0 %v467
    %642 = vmatpush1.bf16.msra.mxu0 %v466
    %643 = vmatprep.subr.bf16.mxu0 %v463
    %644 = vmatpush1.bf16.msra.mxu0 %v462
    %645 = vmatprep.subr.bf16.mxu0 %v523
    %646 = vmatpush2.bf16.msra.mxu0 %v522
    %647 = vmatprep.subr.bf16.mxu0 %v519
    %648 = vmatpush2.bf16.msra.mxu0 %v518
    %649 = vmatprep.subr.bf16.mxu0 %v515
    %650 = vmatpush2.bf16.msra.mxu0 %v514
    %651 = vmatprep.subr.bf16.mxu0 %v511
    %652 = vmatpush2.bf16.msra.mxu0 %v510
    %653 = vmatprep.subr.bf16.mxu0 %v507
    %654 = vmatpush2.bf16.msra.mxu0 %v506
    %655 = vmatprep.subr.bf16.mxu0 %v503
    %656 = vmatpush2.bf16.msra.mxu0 %v502
    %657 = vmatprep.subr.bf16.mxu0 %v499
    %658 = vmatpush2.bf16.msra.mxu0 %v498
    %659 = vmatprep.subr.bf16.mxu0 %v495
    %660 = vmatpush2.bf16.msra.mxu0 %v494
    %661 = vmatprep.mubr.bf16.mxu0 %v203
    %662 = vmatmul.mubr.bf16.gmra.mxu0 %v202
    %v663 = vpop.f32.mrf.mxu0
    %v664 = vadd.f32 0.0, %v663
    %v665 = vpop.f32.mrf.mxu0
    %v666 = vadd.f32 0.0, %v665
    %v667 = vpop.f32.mrf.mxu0
    %v668 = vpop.f32.mrf.mxu0
    %669 = vdwg.mxu0
    %v670 = vmax.f32 %v623, %v664
    %v671 = vmax.f32 %v625, %v666
    %v672 = vld [vmem:[%s4] sm:$0x3]
    %v674 = vlaneseq
    %v675 = vshrl.u32 %v674, 7
    %v676 = vsub.s32 0, %v675
    %v677 = vrot.slane %v672, %v676
    %v678 = vlaneseq
    %v679 = vshrl.u32 %v678, 7
    %v680 = vsub.s32 1, %v679
    %v681 = vrot.slane %v672, %v680
    %v684 = vadd.f32 %v670, %v677
    %v685 = vadd.f32 %v671, %v681
    %v686 = vmax.f32 %v684, 0.0
    %v687 = vmax.f32 %v685, 0.0
    %688 = vst [vmem:[%s5] sm:$0xff] %v686
    %689 = vst [vmem:[%s5 + $0x8] sm:$0xff] %v687
    // Predicated region
    $region30: #{encoder_forward.1} parent=1 // pred_check
      _
    $region31: #{encoder_forward.1} parent=1 // pred_check_branch
      %691 = sbr.rel (0) target = $region33
    $region32: #{encoder_forward.1} parent=1 // pred_region
      _
    $region33: #{encoder_forward.1} parent=1 // pred_fallthru
      _
    // Predicated region
    $region34: #{encoder_forward.1} parent=1 // pred_check
      _
    $region35: #{encoder_forward.1} parent=1 // pred_check_branch
      %693 = sbr.rel (0) target = $region37
    $region36: #{encoder_forward.1} parent=1 // pred_region
      _
    $region37: #{encoder_forward.1} parent=1 // pred_fallthru
      _
    %694 = vsyncpa [#allocation3], 1
    %695 = vsyncpa [#allocation5], 1

</llo_original>
